<compile_context>
chip_gen: v6e
topology: v6e:2x2x1
jax: 0.10.0
libtpu: 0.0.40
codegen_flags: <defaults>
</compile_context>

<pallas_src>
import math
import functools

import jax
import jax.numpy as jnp
from jax import lax
from jax.experimental import pallas as pl
from jax.experimental.pallas import tpu as pltpu


def _round_up(x, mult):
    return ((x + mult - 1) // mult) * mult


def _vmem_capacity_bytes():
    try:
        cap = int(pltpu.get_tpu_info().vmem_capacity_bytes)
        if cap > 0:
            return cap
    except Exception:
        pass
    return 64 * 1024 * 1024  # conservative (v7x-sized) fallback


def _select_tile_c(C, D, w_itemsize, B, requested):
    """Pick TILE_C: ~2 MiB W tiles, clamped to the per-generation VMEM budget."""
    vmem_cap = _vmem_capacity_bytes()
    # ~32 MiB headroom on 128 MiB chips (v5e/v6e -> ~96 MiB budget); half of
    # VMEM on small-VMEM chips (v7x 64 MiB -> 32 MiB budget).
    budget = max(vmem_cap - (32 << 20), vmem_cap // 2)

    resident = B * D * 8 + 4096                    # x (+ f32 temps) + label + slack
    # Bytes per class column while a tile is live: 2x double-buffered W rows,
    # the (w*w) temp, 2x double-buffered out columns, and the (B, TILE_C)
    # f32/int in-kernel temporaries (raw dot, cosine, iota, select).
    per_c = 3 * D * w_itemsize + 8 * B * 4
    max_tile_c = max(128, ((budget - resident) // per_c) // 128 * 128)

    if requested is not None:
        tile_c = _round_up(int(requested), 128)
    else:
        # ~2 MiB streamed W tile (amortizes the ~0.35us per-grid-step overhead),
        # 256-aligned for clean MXU tiling, no bigger than C needs.
        tile_c = _round_up(max(512, (2 << 20) // max(D * w_itemsize, 1)), 256)
        tile_c = min(tile_c, _round_up(C, 128))
        # Keep >= 2 grid steps when possible (lets the "parallel" C axis be
        # split across the two TensorCores on v7x).
        if C > 128 and _round_up(C, tile_c) // tile_c < 2:
            tile_c = max(128, _round_up(pl.cdiv(C, 2), 128))

    tile_c = max(128, min(tile_c, max_tile_c))
    return tile_c, budget


def _arcface_kernel(x_ref, w_ref, label_ref, o_ref, *,
                    s, cos_m, sin_m, th, mm, easy_margin, tile_c):
    # x: (B, D) resident; w: (TILE_C, D) streamed (raw dtype); label: (B, 1) i32.
    w = w_ref[...]
    x = x_ref[...].astype(jnp.float32)
    d = x_ref.shape[1]

    # Row-normalize x (tiny: B*D elements; rsqrt goes to the EUP slot).
    inv_x = lax.rsqrt(jnp.maximum(jnp.sum(x * x, axis=-1, keepdims=True), 1e-24))
    x_n = (x * inv_x).astype(w.dtype)                      # (B, D) matmul dtype

    # Per-class sum-of-squares of the RAW streamed tile, reduced on the MXU so
    # the result is lane-dense along classes with f32 accumulation.
    # (8-row ones operand keeps classic (8, D) matmul shapes; cost is tiny.)
    ones = jnp.ones((8, d), dtype=w.dtype)
    w_sumsq = lax.dot_general(
        ones, w * w,
        dimension_numbers=(((1,), (1,)), ((), ())),
        preferred_element_type=jnp.float32)[0:1, :]        # (1, TILE_C)
    inv_w = lax.rsqrt(jnp.maximum(w_sumsq, 1e-24))         # (1, TILE_C) lane-dense

    # cosine = (x_n @ W^T) * inv_w : normalization applied to the small
    # (B, TILE_C) output, not the (TILE_C, D) weight tile.
    cosine = lax.dot_general(
        x_n, w,
        dimension_numbers=(((1,), (1,)), ((), ())),
        preferred_element_type=jnp.float32) * inv_w        # (B, TILE_C) f32

    labels = label_ref[...]                                # (B, 1) int32
    col0 = pl.program_id(0) * tile_c
    classes = col0 + lax.broadcasted_iota(jnp.int32, cosine.shape, 1)
    is_target = classes == labels                          # (B, TILE_C)

    # Margin math only on the target column (B values, not B*TILE_C).
    target_cos = jnp.sum(jnp.where(is_target, cosine, 0.0),
                         axis=-1, keepdims=True)           # (B, 1)
    sine = jnp.sqrt(jnp.clip(1.0 - target_cos * target_cos, 0.0, 1.0))
    phi = target_cos * cos_m - sine * sin_m
    if easy_margin:
        phi = jnp.where(target_cos > 0.0, phi, target_cos)
    else:
        phi = jnp.where(target_cos > th, phi, target_cos - mm)

    # Single select + scale epilogue (no float one-hot blend).
    o_ref[...] = (jnp.where(is_target, phi, cosine) * s).astype(o_ref.dtype)


def arc_margin_product(x, weight, label, *, s=30.0, m=0.5, easy_margin=False,
                       tile_c=None, matmul_dtype=jnp.bfloat16):
    """ArcFace logits.  x: (B, D) f32, weight: (C, D), label: (B,) int.

    matmul_dtype: dtype W is streamed in / fed to the MXU (f32 accumulation).
    Default bf16 halves the dominant HBM traffic; pass jnp.float32 (or None to
    keep the weight's dtype) for exact f32 parity.
    """
    B, D = x.shape
    C, D2 = weight.shape
    assert D == D2, "feature dims must match"

    w_call = weight if matmul_dtype is None else weight.astype(matmul_dtype)
    w_itemsize = jnp.dtype(w_call.dtype).itemsize

    tile_c, budget = _select_tile_c(C, D, w_itemsize, B, tile_c)
    c_pad = _round_up(C, tile_c)
    if c_pad != C:
        # Zero rows give cosine == 0 and are never selected by a valid label.
        w_call = jnp.pad(w_call, ((0, c_pad - C), (0, 0)))

    x_call = x.astype(jnp.float32)
    label2d = label.astype(jnp.int32).reshape(B, 1)

    kernel = functools.partial(
        _arcface_kernel,
        s=float(s),
        cos_m=math.cos(m),
        sin_m=math.sin(m),
        th=math.cos(math.pi - m),
        mm=math.sin(math.pi - m) * m,
        easy_margin=easy_margin,
        tile_c=tile_c,
    )

    # Actual double-buffered + temporary requirement (tile_c was already
    # clamped so this fits `budget`); declare it plus slack, never below need.
    need = (3 * tile_c * D * w_itemsize     # dbl-buffered W tiles + (w*w) temp
            + 2 * B * tile_c * 4            # dbl-buffered out tiles
            + 6 * B * tile_c * 4            # (B, TILE_C) in-kernel temporaries
            + B * D * 8 + 4096)             # resident x/label (+ f32 temps)
    vmem_limit = int(min(budget, max(16 << 20, need + (4 << 20))))

    grid = c_pad // tile_c
    out = pl.pallas_call(
        kernel,
        out_shape=jax.ShapeDtypeStruct((B, c_pad), jnp.float32),
        grid_spec=pltpu.PrefetchScalarGridSpec(
            num_scalar_prefetch=0,
            grid=(grid,),
            in_specs=[
                pl.BlockSpec((B, D), lambda j: (0, 0)),        # x (resident)
                pl.BlockSpec((tile_c, D), lambda j: (j, 0)),   # W tile (streamed)
                pl.BlockSpec((B, 1), lambda j: (0, 0)),        # label (resident)
            ],
            out_specs=pl.BlockSpec((B, tile_c), lambda j: (0, j)),
        ),
        compiler_params=pltpu.CompilerParams(
            dimension_semantics=("parallel",),   # shard C tiles across TCs (v7x)
            vmem_limit_bytes=vmem_limit,
        ),
        cost_estimate=pl.CostEstimate(
            flops=2 * (B + 8) * c_pad * D + c_pad * D + grid * 3 * B * D,
            transcendentals=c_pad + 2 * B * grid,
            bytes_accessed=(c_pad * D * w_itemsize
                            + grid * (B * D * 4 + B * 4)
                            + B * c_pad * 4),
        ),
    )(x_call, w_call, label2d)

    return out[:, :C] if c_pad != C else out


def _reference(x, weight, label, *, s=30.0, m=0.5, easy_margin=False):
    """Pure-JAX reference mirroring the PyTorch forward."""
    xn = x / jnp.maximum(jnp.linalg.norm(x, axis=1, keepdims=True), 1e-12)
    wn = weight / jnp.maximum(jnp.linalg.norm(weight, axis=1, keepdims=True), 1e-12)
    cosine = xn @ wn.T
    sine = jnp.sqrt(jnp.clip(1.0 - cosine ** 2, 0.0, 1.0))
    phi = cosine * math.cos(m) - sine * math.sin(m)
    if easy_margin:
        phi = jnp.where(cosine > 0, phi, cosine)
    else:
        phi = jnp.where(cosine > math.cos(math.pi - m),
                        phi, cosine - math.sin(math.pi - m) * m)
    one_hot = jax.nn.one_hot(label, weight.shape[0], dtype=cosine.dtype)
    return (one_hot * phi + (1.0 - one_hot) * cosine) * s


if __name__ == "__main__":
    B = 8
    IN_FEATURES = 128

    key = jax.random.PRNGKey(0)
    kx, kw, kl = jax.random.split(key, 3)

    x = jax.random.normal(kx, (B, IN_FEATURES), dtype=jnp.float32)

    def make_w(out_features, k):
        bound = math.sqrt(6.0 / (IN_FEATURES + out_features))  # xavier_uniform_
        return jax.random.uniform(k, (out_features, IN_FEATURES),
                                  minval=-bound, maxval=bound, dtype=jnp.float32)

    # 1) f32 streaming, default tile selection (2 grid steps over C=256).
    C1 = 256
    w1 = make_w(C1, kw)
    lab1 = jax.random.randint(kl, (B,), 0, C1, dtype=jnp.int32)
    out1 = jax.block_until_ready(
        arc_margin_product(x, w1, lab1, s=30.0, m=0.5, easy_margin=False,
                           matmul_dtype=jnp.float32))
    ref1 = _reference(x, w1, lab1, s=30.0, m=0.5, easy_margin=False)
    assert out1.shape == (B, C1)
    assert jnp.allclose(out1, ref1, atol=5e-4, rtol=5e-4), "f32 mismatch vs reference"

    # 2) f32 streaming, C not a multiple of the tile (padding + slice), easy_margin.
    C2 = 200
    w2 = make_w(C2, jax.random.fold_in(kw, 1))
    lab2 = jax.random.randint(jax.random.fold_in(kl, 1), (B,), 0, C2, dtype=jnp.int32)
    out2 = jax.block_until_ready(
        arc_margin_product(x, w2, lab2, s=30.0, m=0.5, easy_margin=True,
                           matmul_dtype=jnp.float32))
    ref2 = _reference(x, w2, lab2, s=30.0, m=0.5, easy_margin=True)
    assert out2.shape == (B, C2)
    assert jnp.allclose(out2, ref2, atol=5e-4, rtol=5e-4), "padded f32 mismatch"

    # 3) Explicit tile override covering the whole C in one grid step (f32).
    out3 = jax.block_until_ready(
        arc_margin_product(x, w1, lab1, s=30.0, m=0.5, easy_margin=False,
                           tile_c=256, matmul_dtype=jnp.float32))
    assert out3.shape == (B, C1)
    assert jnp.allclose(out3, ref1, atol=5e-4, rtol=5e-4), "single-tile f32 mismatch"

    # 4) Default path: bf16-streamed weights (halved HBM traffic), f32 accumulate.
    out4 = jax.block_until_ready(
        arc_margin_product(x, w1, lab1, s=30.0, m=0.5, easy_margin=False))
    assert out4.shape == (B, C1)
    assert jnp.allclose(out4, ref1, atol=0.3, rtol=2e-2), "bf16 mismatch vs reference"

    print("KERNEL_OK")
</pallas_src>

<mosaic_0001>
module attributes {stable_mosaic.version = 11 : i64} {
  func.func @_arcface_kernel(%arg0: i32, %arg1: memref<8x128xf32, #tpu.memory_space<vmem>>, %arg2: memref<128x128xf32, #tpu.memory_space<vmem>>, %arg3: memref<8x1xi32, #tpu.memory_space<vmem>>, %arg4: memref<8x128xf32, #tpu.memory_space<vmem>>) attributes {dimension_semantics = [#tpu.dimension_semantics<parallel>], iteration_bounds = array<i64: 2>, scalar_prefetch = 0 : i64, scratch_operands = 0 : i64, tpu.core_type = #tpu.core_type<tc>, window_params = [{pipeline_mode = #tpu.pipeline_mode<synchronous>, transform_indices = @transform_0, window_bounds = array<i64: 8, 128>}, {transform_indices = @transform_1, window_bounds = array<i64: 128, 128>}, {pipeline_mode = #tpu.pipeline_mode<synchronous>, transform_indices = @transform_2, window_bounds = array<i64: 8, 1>}, {transform_indices = @transform_3, window_bounds = array<i64: 8, 128>}]} {
    %c0 = arith.constant 0 : index
    %c0_0 = arith.constant 0 : index
    %0 = vector.load %arg2[%c0, %c0_0] : memref<128x128xf32, #tpu.memory_space<vmem>>, vector<128x128xf32>
    %c0_1 = arith.constant 0 : index
    %c0_2 = arith.constant 0 : index
    %1 = vector.load %arg1[%c0_1, %c0_2] : memref<8x128xf32, #tpu.memory_space<vmem>>, vector<8x128xf32>
    %2 = arith.mulf %1, %1 : vector<8x128xf32>
    %cst = arith.constant dense<0.000000e+00> : vector<8xf32>
    %3 = vector.multi_reduction <add>, %2, %cst [1] : vector<8x128xf32> to vector<8xf32>
    %4 = vector.shape_cast %3 : vector<8xf32> to vector<8x1xf32>
    %cst_3 = arith.constant 1.000000e-24 : f32
    %5 = vector.broadcast %cst_3 : f32 to vector<8x1xf32>
    %6 = arith.maximumf %4, %5 : vector<8x1xf32>
    %7 = math.rsqrt %6 : vector<8x1xf32>
    %8 = vector.broadcast %7 : vector<8x1xf32> to vector<8x128xf32>
    %9 = arith.mulf %1, %8 : vector<8x128xf32>
    %cst_4 = arith.constant 1.000000e+00 : f32
    %10 = vector.broadcast %cst_4 : f32 to vector<8x128xf32>
    %11 = arith.mulf %0, %0 : vector<128x128xf32>
    %cst_5 = arith.constant dense<0.000000e+00> : vector<8x128xf32>
    %12 = tpu.matmul %10, %11, %cst_5 {dimension_numbers = #tpu.dot_dimension_numbers<[1], [1], [0], [0], [0, 0, 1, 0], [], []>} : vector<8x128xf32>, vector<128x128xf32>, vector<8x128xf32> -> vector<8x128xf32>
    %13 = vector.extract_strided_slice %12 {offsets = [0, 0], sizes = [1, 128], strides = [1, 1]} : vector<8x128xf32> to vector<1x128xf32>
    %cst_6 = arith.constant 1.000000e-24 : f32
    %14 = vector.broadcast %cst_6 : f32 to vector<1x128xf32>
    %15 = arith.maximumf %13, %14 : vector<1x128xf32>
    %16 = math.rsqrt %15 : vector<1x128xf32>
    %cst_7 = arith.constant dense<0.000000e+00> : vector<8x128xf32>
    %17 = tpu.matmul %9, %0, %cst_7 {dimension_numbers = #tpu.dot_dimension_numbers<[1], [1], [0], [0], [0, 0, 1, 0], [], []>} : vector<8x128xf32>, vector<128x128xf32>, vector<8x128xf32> -> vector<8x128xf32>
    %18 = vector.broadcast %16 : vector<1x128xf32> to vector<8x128xf32>
    %19 = arith.mulf %17, %18 : vector<8x128xf32>
    %c0_8 = arith.constant 0 : index
    %c0_9 = arith.constant 0 : index
    %20 = vector.load %arg3[%c0_8, %c0_9] : memref<8x1xi32, #tpu.memory_space<vmem>>, vector<8x1xi32>
    %c128_i32 = arith.constant 128 : i32
    %21 = arith.muli %arg0, %c128_i32 : i32
    %22 = tpu.iota {dimensions = array<i32: 1>} : vector<8x128xi32>
    %23 = vector.broadcast %21 : i32 to vector<8x128xi32>
    %24 = arith.addi %23, %22 : vector<8x128xi32>
    %25 = vector.broadcast %20 : vector<8x1xi32> to vector<8x128xi32>
    %26 = arith.cmpi eq, %24, %25 : vector<8x128xi32>
    %cst_10 = arith.constant 0.000000e+00 : f32
    %27 = vector.broadcast %cst_10 : f32 to vector<8x128xf32>
    %28 = arith.select %26, %19, %27 : vector<8x128xi1>, vector<8x128xf32>
    %cst_11 = arith.constant dense<0.000000e+00> : vector<8xf32>
    %29 = vector.multi_reduction <add>, %28, %cst_11 [1] : vector<8x128xf32> to vector<8xf32>
    %30 = vector.shape_cast %29 : vector<8xf32> to vector<8x1xf32>
    %31 = arith.mulf %30, %30 : vector<8x1xf32>
    %cst_12 = arith.constant 1.000000e+00 : f32
    %32 = vector.broadcast %cst_12 : f32 to vector<8x1xf32>
    %33 = arith.subf %32, %31 : vector<8x1xf32>
    %cst_13 = arith.constant 0.000000e+00 : f32
    %cst_14 = arith.constant 1.000000e+00 : f32
    %34 = vector.broadcast %cst_13 : f32 to vector<8x1xf32>
    %35 = arith.maximumf %34, %33 : vector<8x1xf32>
    %36 = vector.broadcast %cst_14 : f32 to vector<8x1xf32>
    %37 = arith.minimumf %36, %35 : vector<8x1xf32>
    %38 = math.sqrt %37 : vector<8x1xf32>
    %cst_15 = arith.constant 0.87758255 : f32
    %39 = vector.broadcast %cst_15 : f32 to vector<8x1xf32>
    %40 = arith.mulf %30, %39 : vector<8x1xf32>
    %cst_16 = arith.constant 0.47942555 : f32
    %41 = vector.broadcast %cst_16 : f32 to vector<8x1xf32>
    %42 = arith.mulf %38, %41 : vector<8x1xf32>
    %43 = arith.subf %40, %42 : vector<8x1xf32>
    %cst_17 = arith.constant -0.87758255 : f32
    %44 = vector.broadcast %cst_17 : f32 to vector<8x1xf32>
    %45 = arith.cmpf ogt, %30, %44 : vector<8x1xf32>
    %cst_18 = arith.constant 0.239712775 : f32
    %46 = vector.broadcast %cst_18 : f32 to vector<8x1xf32>
    %47 = arith.subf %30, %46 : vector<8x1xf32>
    %48 = arith.select %45, %43, %47 : vector<8x1xi1>, vector<8x1xf32>
    %49 = vector.shape_cast %48 : vector<8x1xf32> to vector<8x1xf32>
    %50 = vector.broadcast %49 : vector<8x1xf32> to vector<8x128xf32>
    %51 = arith.select %26, %50, %19 : vector<8x128xi1>, vector<8x128xf32>
    %cst_19 = arith.constant 3.000000e+01 : f32
    %52 = vector.broadcast %cst_19 : f32 to vector<8x128xf32>
    %53 = arith.mulf %51, %52 : vector<8x128xf32>
    %c0_20 = arith.constant 0 : index
    %c0_21 = arith.constant 0 : index
    %54 = vector.load %arg4[%c0_20, %c0_21] : memref<8x128xf32, #tpu.memory_space<vmem>>, vector<8x128xf32>
    tpu.vector_store %arg4[%c0_20, %c0_21], %53 {strides = array<i32>} : memref<8x128xf32, #tpu.memory_space<vmem>>, vector<8x128xf32>,
    return
  }
  func.func @transform_0(%arg0: i32) -> (i32, i32) {
    %c0_i32 = arith.constant 0 : i32
    %c0_i32_0 = arith.constant 0 : i32
    %c0_i32_1 = arith.constant 0 : i32
    return %c0_i32, %c0_i32_0 : i32, i32
  }
  func.func @transform_1(%arg0: i32) -> (i32, i32) {
    %c0_i32 = arith.constant 0 : i32
    %c0_i32_0 = arith.constant 0 : i32
    return %arg0, %c0_i32 : i32, i32
  }
  func.func @transform_2(%arg0: i32) -> (i32, i32) {
    %c0_i32 = arith.constant 0 : i32
    %c0_i32_0 = arith.constant 0 : i32
    %c0_i32_1 = arith.constant 0 : i32
    return %c0_i32, %c0_i32_0 : i32, i32
  }
  func.func @transform_3(%arg0: i32) -> (i32, i32) {
    %c0_i32 = arith.constant 0 : i32
    %c0_i32_0 = arith.constant 0 : i32
    return %c0_i32, %arg0 : i32, i32
  }
}

</mosaic_0001>

<llo_original>
// kernel: tpu_custom_call.1
$region0: #{tpu_custom_call.1}
  #allocation0 [shape = 'u32[]', space=smem, size = 0x4, offset = 0x4, fixed_abs, tag = 'smem constant byte address 0x4 - core index']
  #allocation1 [shape = 'u32[144,128]{1,0:T(1,128)}', space=vmem, size = 0x12000, scoped, tag = 'internal scratch']
  %s0 = inlined_call_operand.vmem [shape: f32[8,128], index: 0, kind: input, shape index: {}]
  %s1 = inlined_call_operand.hbm [shape: f32[256,128], index: 1, kind: input, shape index: {}]
  %s2 = inlined_call_operand.vmem [shape: s32[8,1], index: 2, kind: input, shape index: {}]
  %s3 = inlined_call_operand.hbm [shape: f32[8,256], index: 3, kind: output, shape index: {}]
  %s4 = sld [smem:[#allocation0]]
  $region49: #{tpu_custom_call.1} parent=0
    _
  %s6 = ssub.s32 1, %s4
  %s7 = scalar_select 0, %s6, %s4
  $region1: #{tpu_custom_call.1} parent=0
    #allocation2 [shape = 'u8[131072]{0}', space=vmem, size = 0x20000, scoped, tag = 'input window, operand 1']
    #allocation3 [shape = 's32[2]{0}', space=sflag, size = 0x8, scoped, tag = 'scoped memory for tpu_custom_call.1']
    #allocation4 [shape = 's32[2]{0}', space=sflag, size = 0x8, scoped, tag = 'scoped memory for tpu_custom_call.1']
    #allocation5 [shape = 'u8[8192]{0}', space=vmem, size = 0x2000, scoped, tag = 'output window, operand 0']
    %8 = vsyncpa [#allocation3], 0
    %s9 = scalar_lea.sflag [#allocation3], 1
    %10 = vsyncpa %s9, 0
    %11 = vsyncpa [#allocation4], 0
    %s12 = scalar_lea.sflag [#allocation4], 1
    %13 = vsyncpa %s12, 0
    loop: start=0, step=1, limit=4
    $region2: #{tpu_custom_call.1} parent=1 // loop_pre_header
      _
    $region3: #{tpu_custom_call.1} parent=1 // loop_header
      %s15 = sphi 0, %s19
      %p16 = scmp.ge.s32.totalorder %s15, 4
      %s23 = sphi 0, %s23
      %s25 = sphi 0, %s23
      %s26 = sphi 0, %s25
      %s40 = sphi 0, %s26
      %s46 = sphi 0, %s48
      %s49 = sphi 0, %s46
      %s50 = sphi 0, %s49
      %s66 = sphi 0, %s50
      %s70 = sphi 0, %s70
      %s72 = sphi 0, %s70
      %s73 = sphi 0, %s72
      %s87 = sphi 0, %s73
      %s93 = sphi 0, %s95
      %s96 = sphi 0, %s93
      %s97 = sphi 0, %s96
      %s113 = sphi 0, %s97
    $region4: #{tpu_custom_call.1} parent=1 // loop_header_branch
      %18 = sbr.rel (%p16) target = $region8
    $region5: #{tpu_custom_call.1} parent=1 // loop_body
      %s20 = ssub.s32 %s15, 1
      %s21 = ssub.s32 %s15, 2
      %s22 = sadd.s32 %s15, 1
      %s24 = sadd.s32 %s23, 1
      %p27 = scmp.eq.s32.totalorder %s15, 1
      %p28 = scmp.ne.s32.totalorder %s23, %s25
      %p29 = scmp.eq.s32.totalorder %s15, 0
      %p30 = por %p28, %p29
      %p31 = scmp.ne.s32.totalorder %s23, %s25
      %p32 = scmp.eq.s32.totalorder %s20, 1
      %p33 = por %p31, %p32
      %p34 = scmp.ne.s32.totalorder %s25, %s26
      %p35 = scmp.eq.s32.totalorder %s20, 0
      %p36 = por %p34, %p35
      %p37 = scmp.ne.s32.totalorder %s25, %s26
      %p38 = scmp.eq.s32.totalorder %s21, 1
      %p39 = por %p37, %p38
      %p41 = scmp.ne.s32.totalorder %s26, %s40
      %p42 = scmp.eq.s32.totalorder %s21, 0
      %p43 = por %p41, %p42
      %s44 = ssub.s32 %s15, %s22
      %p45 = scmp.eq.s32.totalorder %s44, 0
      %s47 = sadd.s32 %s46, 1
      %s48 = scalar_select %p45, %s46, %s47
      %p51 = pneg %p45
      %p52 = scmp.eq.s32.totalorder %s15, 1
      %p53 = por %p51, %p52
      %p54 = scmp.ne.s32.totalorder %s46, %s49
      %p55 = scmp.eq.s32.totalorder %s15, 0
      %p56 = por %p54, %p55
      %p57 = scmp.ne.s32.totalorder %s46, %s49
      %p58 = scmp.eq.s32.totalorder %s20, 1
      %p59 = por %p57, %p58
      %p60 = scmp.ne.s32.totalorder %s49, %s50
      %p61 = scmp.eq.s32.totalorder %s20, 0
      %p62 = por %p60, %p61
      %p63 = scmp.ne.s32.totalorder %s49, %s50
      %p64 = scmp.eq.s32.totalorder %s21, 1
      %p65 = por %p63, %p64
      %p67 = scmp.ne.s32.totalorder %s50, %s66
      %p68 = scmp.eq.s32.totalorder %s21, 0
      %p69 = por %p67, %p68
      %s71 = sadd.s32 %s70, 1
      %p74 = scmp.eq.s32.totalorder %s15, 1
      %p75 = scmp.ne.s32.totalorder %s70, %s72
      %p76 = scmp.eq.s32.totalorder %s15, 0
      %p77 = por %p75, %p76
      %p78 = scmp.ne.s32.totalorder %s70, %s72
      %p79 = scmp.eq.s32.totalorder %s20, 1
      %p80 = por %p78, %p79
      %p81 = scmp.ne.s32.totalorder %s72, %s73
      %p82 = scmp.eq.s32.totalorder %s20, 0
      %p83 = por %p81, %p82
      %p84 = scmp.ne.s32.totalorder %s72, %s73
      %p85 = scmp.eq.s32.totalorder %s21, 1
      %p86 = por %p84, %p85
      %p88 = scmp.ne.s32.totalorder %s73, %s87
      %p89 = scmp.eq.s32.totalorder %s21, 0
      %p90 = por %p88, %p89
      %s91 = ssub.s32 %s15, %s22
      %p92 = scmp.eq.s32.totalorder %s91, 0
      %s94 = sadd.s32 %s93, 1
      %s95 = scalar_select %p92, %s93, %s94
      %p98 = pneg %p92
      %p99 = scmp.eq.s32.totalorder %s15, 1
      %p100 = por %p98, %p99
      %p101 = scmp.ne.s32.totalorder %s93, %s96
      %p102 = scmp.eq.s32.totalorder %s15, 0
      %p103 = por %p101, %p102
      %p104 = scmp.ne.s32.totalorder %s93, %s96
      %p105 = scmp.eq.s32.totalorder %s20, 1
      %p106 = por %p104, %p105
      %p107 = scmp.ne.s32.totalorder %s96, %s97
      %p108 = scmp.eq.s32.totalorder %s20, 0
      %p109 = por %p107, %p108
      %p110 = scmp.ne.s32.totalorder %s96, %s97
      %p111 = scmp.eq.s32.totalorder %s21, 1
      %p112 = por %p110, %p111
      %p114 = scmp.ne.s32.totalorder %s97, %s113
      %p115 = scmp.eq.s32.totalorder %s21, 0
      %p116 = por %p114, %p115
      %p117 = scmp.le.s32.totalorder 1, %s15
      %p118 = scmp.lt.s32.totalorder %s15, 3
      %p119 = pnand %p117, %p118
      %p120 = pneg %p119
      // Predicated region
      $region9: #{tpu_custom_call.1} parent=5 // pred_check
        _
      $region10: #{tpu_custom_call.1} parent=5 // pred_check_branch
        %122 = sbr.rel (%p119) target = $region12
      $region11: #{tpu_custom_call.1} parent=5 // pred_region
        %s123 = ssub.s32 %s15, 1
        // Predicated region
        $region13: #{tpu_custom_call.1} parent=11 // pred_check
          %p124 = pneg %p36
        $region14: #{tpu_custom_call.1} parent=11 // pred_check_branch
          %126 = sbr.rel (%p124) target = $region16
        $region15: #{tpu_custom_call.1} parent=11 // pred_region
          _
        $region16: #{tpu_custom_call.1} parent=11 // pred_fallthru
          _
        // Predicated region
        $region17: #{tpu_custom_call.1} parent=11 // pred_check
          %p127 = pneg %p83
        $region18: #{tpu_custom_call.1} parent=11 // pred_check_branch
          %129 = sbr.rel (%p127) target = $region20
        $region19: #{tpu_custom_call.1} parent=11 // pred_region
          _
        $region20: #{tpu_custom_call.1} parent=11 // pred_fallthru
          _
      $region12: #{tpu_custom_call.1} parent=5 // pred_fallthru
        _
      %p130 = scmp.lt.s32.totalorder %s15, 2
      // Predicated region
      $region21: #{tpu_custom_call.1} parent=5 // pred_check
        %p131 = pneg %p130
      $region22: #{tpu_custom_call.1} parent=5 // pred_check_branch
        %133 = sbr.rel (%p131) target = $region24
      $region23: #{tpu_custom_call.1} parent=5 // pred_region
        // Predicated region
        $region25: #{tpu_custom_call.1} parent=23 // pred_check
          %p134 = pneg %p56
        $region26: #{tpu_custom_call.1} parent=23 // pred_check_branch
          %136 = sbr.rel (%p134) target = $region28
        $region27: #{tpu_custom_call.1} parent=23 // pred_region
          %s137 = sand.u32 %s46, 1
          %s138 = scalar_lea.sflag [#allocation3], %s137
          %s139 = sand.u32 %s46, 1
          %s140 = smul.addr %s139, 128
          %s141 = scalar_lea.vmem [#allocation2], %s140
          %s142 = smul.u32 16, %s15
          %s144 = ssub.s32 2048, 2048
          %145 = vsyncadd %s138, %s144
          %s146 = smul.addr %s142, 128
          %s147 = scalar_lea.hbm %s1, %s146
          %s148 = sshll.u32 %s141, 4
          %s149 = int_to_ptr.vmem [resolvable:$true] %s148
          %154 = dma.hbm_to_vmem [thread:$0]  %s147, 2048, %s149, %s138, 128, 128, 8
        $region28: #{tpu_custom_call.1} parent=23 // pred_fallthru
          _
      $region24: #{tpu_custom_call.1} parent=5 // pred_fallthru
        _
      %p155 = scmp.le.s32.totalorder 1, %s15
      %p156 = scmp.lt.s32.totalorder %s15, 3
      %p157 = pnand %p155, %p156
      %p158 = pneg %p157
      // Predicated region
      $region29: #{tpu_custom_call.1} parent=5 // pred_check
        _
      $region30: #{tpu_custom_call.1} parent=5 // pred_check_branch
        %160 = sbr.rel (%p157) target = $region32
      $region31: #{tpu_custom_call.1} parent=5 // pred_region
        %s161 = ssub.s32 %s15, 1
        %s162 = sand.u32 %s49, 1
        %s163 = scalar_lea.sflag [#allocation3], %s162
        %s164 = sand.u32 %s49, 1
        %s165 = smul.addr %s164, 128
        %s166 = scalar_lea.vmem [#allocation2], %s165
        // Predicated region
        $region33: #{tpu_custom_call.1} parent=31 // pred_check
          %p167 = pneg %p62
        $region34: #{tpu_custom_call.1} parent=31 // pred_check_branch
          %169 = sbr.rel (%p167) target = $region36
        $region35: #{tpu_custom_call.1} parent=31 // pred_region
          %170 = dma.done %s163, 2048
        $region36: #{tpu_custom_call.1} parent=31 // pred_fallthru
          _
        %p171 = pneg %p36
        %p172 = pneg %p33
        %s173 = sand.u32 %s49, 1
        %s174 = scalar_lea.sflag [#allocation3], %s173
        %s175 = sand.u32 %s49, 1
        %s176 = smul.addr %s175, 128
        %s177 = scalar_lea.vmem [#allocation2], %s176
        %p178 = pneg %p62
        %p179 = pneg %p59
        %p180 = pneg %p83
        %p181 = pneg %p80
        %p182 = pneg %p109
        %p183 = pneg %p106
        %s184 = sand.u32 %s96, 1
        %s185 = scalar_lea.sflag [#allocation4], %s184
        %s186 = sand.u32 %s96, 1
        %s187 = smul.addr %s186, 8
        %s188 = scalar_lea.vmem [#allocation5], %s187
        %s189 = smul.u32 16, %s20
        %v190 = vld [vmem:[%s166] sm:$0xff]
        %v191 = vld [vmem:[%s166 + $0x8] sm:$0xff]
        %v192 = vld [vmem:[%s166 + $0x10] sm:$0xff]
        %v193 = vld [vmem:[%s166 + $0x18] sm:$0xff]
        %v194 = vld [vmem:[%s166 + $0x20] sm:$0xff]
        %v195 = vld [vmem:[%s166 + $0x28] sm:$0xff]
        %v196 = vld [vmem:[%s166 + $0x30] sm:$0xff]
        %v197 = vld [vmem:[%s166 + $0x38] sm:$0xff]
        %v198 = vld [vmem:[%s166 + $0x40] sm:$0xff]
        %v199 = vld [vmem:[%s166 + $0x48] sm:$0xff]
        %v200 = vld [vmem:[%s166 + $0x50] sm:$0xff]
        %v201 = vld [vmem:[%s166 + $0x58] sm:$0xff]
        %v202 = vld [vmem:[%s166 + $0x60] sm:$0xff]
        %v203 = vld [vmem:[%s166 + $0x68] sm:$0xff]
        %v204 = vld [vmem:[%s166 + $0x70] sm:$0xff]
        %v205 = vld [vmem:[%s166 + $0x78] sm:$0xff]
        %v206 = vld [vmem:[%s0] sm:$0xff]
        %v207 = vmul.f32 %v206, %v206
        %208 = vadd.xlane.f32.xlu0 %v207
        %v209 = vpop.xlane.xlu0 %208
        %v210 = vmax.f32 %v209, 1e-24
        %v211 = vrsqrt.pop %v210
        %v212 = vmul.f32 %v206, %v211
        %v213 = vmul.f32 %v190, %v190
        %v214 = vmul.f32 %v191, %v191
        %v215 = vmul.f32 %v192, %v192
        %v216 = vmul.f32 %v193, %v193
        %v217 = vmul.f32 %v194, %v194
        %v218 = vmul.f32 %v195, %v195
        %v219 = vmul.f32 %v196, %v196
        %v220 = vmul.f32 %v197, %v197
        %v221 = vmul.f32 %v198, %v198
        %v222 = vmul.f32 %v199, %v199
        %v223 = vmul.f32 %v200, %v200
        %v224 = vmul.f32 %v201, %v201
        %v225 = vmul.f32 %v202, %v202
        %v226 = vmul.f32 %v203, %v203
        %v227 = vmul.f32 %v204, %v204
        %v228 = vmul.f32 %v205, %v205
        %229 = vmatprep.subr.mxu0 0.0
        %230 = vmatpush1.xpose.msra.mxu0 %v228
        %231 = vmatprep.subr.mxu0 0.0
        %232 = vmatpush1.xpose.msra.mxu0 %v227
        %233 = vmatprep.subr.mxu0 0.0
        %234 = vmatpush1.xpose.msra.mxu0 %v226
        %235 = vmatprep.subr.mxu0 0.0
        %236 = vmatpush1.xpose.msra.mxu0 %v225
        %237 = vmatprep.subr.mxu0 0.0
        %238 = vmatpush1.xpose.msra.mxu0 %v224
        %239 = vmatprep.subr.mxu0 0.0
        %240 = vmatpush1.xpose.msra.mxu0 %v223
        %241 = vmatprep.subr.mxu0 0.0
        %242 = vmatpush1.xpose.msra.mxu0 %v222
        %243 = vmatprep.subr.mxu0 0.0
        %244 = vmatpush1.xpose.msra.mxu0 %v221
        %245 = vmatprep.subr.mxu0 0.0
        %246 = vmatpush1.xpose.msra.mxu0 %v220
        %247 = vmatprep.subr.mxu0 0.0
        %248 = vmatpush1.xpose.msra.mxu0 %v219
        %249 = vmatprep.subr.mxu0 0.0
        %250 = vmatpush1.xpose.msra.mxu0 %v218
        %251 = vmatprep.subr.mxu0 0.0
        %252 = vmatpush1.xpose.msra.mxu0 %v217
        %253 = vmatprep.subr.mxu0 0.0
        %254 = vmatpush1.xpose.msra.mxu0 %v216
        %255 = vmatprep.subr.mxu0 0.0
        %256 = vmatpush1.xpose.msra.mxu0 %v215
        %257 = vmatprep.subr.mxu0 0.0
        %258 = vmatpush1.xpose.msra.mxu0 %v214
        %259 = vmatprep.subr.mxu0 0.0
        %260 = vmatpush1.xpose.msra.mxu0 %v213
        %261 = vmatprep.subr.mxu0 0.0
        %262 = vmatpush2.xpose.msra.mxu0 0.0
        %263 = vmatprep.subr.mxu0 0.0
        %264 = vmatpush2.xpose.msra.mxu0 0.0
        %265 = vmatprep.subr.mxu0 0.0
        %266 = vmatpush2.xpose.msra.mxu0 0.0
        %267 = vmatprep.subr.mxu0 0.0
        %268 = vmatpush2.xpose.msra.mxu0 0.0
        %269 = vmatprep.subr.mxu0 0.0
        %270 = vmatpush2.xpose.msra.mxu0 0.0
        %271 = vmatprep.subr.mxu0 0.0
        %272 = vmatpush2.xpose.msra.mxu0 0.0
        %273 = vmatprep.subr.mxu0 0.0
        %274 = vmatpush2.xpose.msra.mxu0 0.0
        %275 = vmatprep.subr.mxu0 0.0
        %276 = vmatpush2.xpose.msra.mxu0 0.0
        %277 = vmatprep.subr.mxu0 0.0
        %278 = vmatpush2.xpose.msra.mxu0 0.0
        %279 = vmatprep.subr.mxu0 0.0
        %280 = vmatpush2.xpose.msra.mxu0 0.0
        %281 = vmatprep.subr.mxu0 0.0
        %282 = vmatpush2.xpose.msra.mxu0 0.0
        %283 = vmatprep.subr.mxu0 0.0
        %284 = vmatpush2.xpose.msra.mxu0 0.0
        %285 = vmatprep.subr.mxu0 0.0
        %286 = vmatpush2.xpose.msra.mxu0 0.0
        %287 = vmatprep.subr.mxu0 0.0
        %288 = vmatpush2.xpose.msra.mxu0 0.0
        %289 = vmatprep.subr.mxu0 0.0
        %290 = vmatpush2.xpose.msra.mxu0 0.0
        %291 = vmatprep.subr.mxu0 0.0
        %292 = vmatpush2.xpose.msra.mxu0 0.0
        %293 = vmatprep.mubr.f32.mxu0 0.0
        %294 = vmatmul.mubr.f32.gmra.mxu0 1.0
        %v295 = vpop.f32.mrf.mxu0
        %v296 = vadd.f32 0.0, %v295
        %v297 = vpop.f32.mrf.mxu0
        %298 = vdwg.mxu0
        %v299 = vmax.f32 %v296, 1e-24
        %v300 = vrsqrt.pop %v299
        %301 = vmatprep.subr.mxu0 0.0
        %302 = vmatpush1.xpose.msra.mxu0 %v205
        %303 = vmatprep.subr.mxu0 0.0
        %304 = vmatpush1.xpose.msra.mxu0 %v204
        %305 = vmatprep.subr.mxu0 0.0
        %306 = vmatpush1.xpose.msra.mxu0 %v203
        %307 = vmatprep.subr.mxu0 0.0
        %308 = vmatpush1.xpose.msra.mxu0 %v202
        %309 = vmatprep.subr.mxu0 0.0
        %310 = vmatpush1.xpose.msra.mxu0 %v201
        %311 = vmatprep.subr.mxu0 0.0
        %312 = vmatpush1.xpose.msra.mxu0 %v200
        %313 = vmatprep.subr.mxu0 0.0
        %314 = vmatpush1.xpose.msra.mxu0 %v199
        %315 = vmatprep.subr.mxu0 0.0
        %316 = vmatpush1.xpose.msra.mxu0 %v198
        %317 = vmatprep.subr.mxu0 0.0
        %318 = vmatpush1.xpose.msra.mxu0 %v197
        %319 = vmatprep.subr.mxu0 0.0
        %320 = vmatpush1.xpose.msra.mxu0 %v196
        %321 = vmatprep.subr.mxu0 0.0
        %322 = vmatpush1.xpose.msra.mxu0 %v195
        %323 = vmatprep.subr.mxu0 0.0
        %324 = vmatpush1.xpose.msra.mxu0 %v194
        %325 = vmatprep.subr.mxu0 0.0
        %326 = vmatpush1.xpose.msra.mxu0 %v193
        %327 = vmatprep.subr.mxu0 0.0
        %328 = vmatpush1.xpose.msra.mxu0 %v192
        %329 = vmatprep.subr.mxu0 0.0
        %330 = vmatpush1.xpose.msra.mxu0 %v191
        %331 = vmatprep.subr.mxu0 0.0
        %332 = vmatpush1.xpose.msra.mxu0 %v190
        %333 = vmatprep.subr.mxu0 0.0
        %334 = vmatpush2.xpose.msra.mxu0 0.0
        %335 = vmatprep.subr.mxu0 0.0
        %336 = vmatpush2.xpose.msra.mxu0 0.0
        %337 = vmatprep.subr.mxu0 0.0
        %338 = vmatpush2.xpose.msra.mxu0 0.0
        %339 = vmatprep.subr.mxu0 0.0
        %340 = vmatpush2.xpose.msra.mxu0 0.0
        %341 = vmatprep.subr.mxu0 0.0
        %342 = vmatpush2.xpose.msra.mxu0 0.0
        %343 = vmatprep.subr.mxu0 0.0
        %344 = vmatpush2.xpose.msra.mxu0 0.0
        %345 = vmatprep.subr.mxu0 0.0
        %346 = vmatpush2.xpose.msra.mxu0 0.0
        %347 = vmatprep.subr.mxu0 0.0
        %348 = vmatpush2.xpose.msra.mxu0 0.0
        %349 = vmatprep.subr.mxu0 0.0
        %350 = vmatpush2.xpose.msra.mxu0 0.0
        %351 = vmatprep.subr.mxu0 0.0
        %352 = vmatpush2.xpose.msra.mxu0 0.0
        %353 = vmatprep.subr.mxu0 0.0
        %354 = vmatpush2.xpose.msra.mxu0 0.0
        %355 = vmatprep.subr.mxu0 0.0
        %356 = vmatpush2.xpose.msra.mxu0 0.0
        %357 = vmatprep.subr.mxu0 0.0
        %358 = vmatpush2.xpose.msra.mxu0 0.0
        %359 = vmatprep.subr.mxu0 0.0
        %360 = vmatpush2.xpose.msra.mxu0 0.0
        %361 = vmatprep.subr.mxu0 0.0
        %362 = vmatpush2.xpose.msra.mxu0 0.0
        %363 = vmatprep.subr.mxu0 0.0
        %364 = vmatpush2.xpose.msra.mxu0 0.0
        %365 = vmatprep.mubr.f32.mxu0 0.0
        %366 = vmatmul.mubr.f32.gmra.mxu0 %v212
        %v367 = vpop.f32.mrf.mxu0
        %v368 = vadd.f32 0.0, %v367
        %v369 = vpop.f32.mrf.mxu0
        %370 = vdwg.mxu0
        %v371 = vlaneseq
        %v372 = vshrl.u32 %v371, 7
        %v373 = vsub.s32 0, %v372
        %v374 = vrot.slane %v300, %v373
        %v375 = vmul.f32 %v368, %v374
        %v376 = vld [vmem:[%s2] sm:$0xff]
        %s377 = smul.u32 %s20, 128
        %v378 = vlaneseq
        %v379 = vand.u32 %v378, 127
        %v380 = vstv %s377
        %v381 = vadd.s32 %v380, %v379
        %382 = vset.pattern.permute.xlu0 0
        %383 = vperm.xlu0 %382, %v376
        %v384 = vpop.permute.xlu0 %383
        %vm385 = vcmp.eq.s32.totalorder %v381, %v384
        %v386 = vsel %vm385, %v375, 0.0
        %387 = vadd.xlane.f32.xlu0 %v386
        %v388 = vpop.xlane.xlu0 %387
        %v389 = vmul.f32 %v388, %v388
        %v390 = vsub.f32 1.0, %v389
        %v391 = vmax.f32 %v390, 0.0
        %v392 = vmin.f32 %v391, 1.0
        %v393 = vrsqrt.pop %v392
        %v394 = vmul.f32 %v392, %v393
        %vm395 = vcmp.eq.f32.partialorder %v392, inf
        %v396 = vsel %vm395, %v392, %v394
        %vm397 = vcmp.eq.f32.partialorder %v392, 0.0
        %v398 = vand.u32 %v392, 2147483648
        %v399 = vsel %vm397, %v398, %v396
        %v400 = vmul.f32 %v388, 0.87758255
        %v401 = vmul.f32 %v399, 0.47942555
        %v402 = vsub.f32 %v400, %v401
        %vm403 = vcmp.gt.f32.partialorder %v388, -0.87758255
        %v404 = vsub.f32 %v388, 0.23971277
        %v405 = vsel %vm403, %v402, %v404
        %v406 = vsel %vm385, %v405, %v375
        %v407 = vmul.f32 %v406, 30.0
        %408 = vst [vmem:[%s188] sm:$0xff] %v407
        %s409 = sand.u32 %s96, 1
        %s410 = scalar_lea.sflag [#allocation4], %s409
        %s411 = sand.u32 %s96, 1
        %s412 = smul.addr %s411, 8
        %s413 = scalar_lea.vmem [#allocation5], %s412
        // Predicated region
        $region37: #{tpu_custom_call.1} parent=31 // pred_check
          %p414 = pneg %p106
        $region38: #{tpu_custom_call.1} parent=31 // pred_check_branch
          %416 = sbr.rel (%p414) target = $region40
        $region39: #{tpu_custom_call.1} parent=31 // pred_region
          %s418 = ssub.s32 128, 128
          %419 = vsyncadd %s410, %s418
          %s420 = smul.addr %s20, 128
          %s421 = scalar_lea.hbm %s3, %s420
          %s423 = sshll.u32 %s413, 4
          %s424 = int_to_ptr.vmem [resolvable:$true] %s423
          %426 = dma.vmem_to_hbm [thread:$0]  %s424, 128, %s421, %s410
        $region40: #{tpu_custom_call.1} parent=31 // pred_fallthru
          _
      $region32: #{tpu_custom_call.1} parent=5 // pred_fallthru
        _
      %p427 = scmp.le.s32.totalorder 2, %s15
      // Predicated region
      $region41: #{tpu_custom_call.1} parent=5 // pred_check
        %p428 = pneg %p427
      $region42: #{tpu_custom_call.1} parent=5 // pred_check_branch
        %430 = sbr.rel (%p428) target = $region44
      $region43: #{tpu_custom_call.1} parent=5 // pred_region
        %s431 = ssub.s32 %s15, 2
        // Predicated region
        $region45: #{tpu_custom_call.1} parent=43 // pred_check
          %p432 = pneg %p112
        $region46: #{tpu_custom_call.1} parent=43 // pred_check_branch
          %434 = sbr.rel (%p432) target = $region48
        $region47: #{tpu_custom_call.1} parent=43 // pred_region
          %s435 = sand.u32 %s97, 1
          %s436 = scalar_lea.sflag [#allocation4], %s435
          %s437 = sand.u32 %s97, 1
          %s438 = smul.addr %s437, 8
          %s439 = scalar_lea.vmem [#allocation5], %s438
          %440 = dma.done %s436, 128
        $region48: #{tpu_custom_call.1} parent=43 // pred_fallthru
          _
      $region44: #{tpu_custom_call.1} parent=5 // pred_fallthru
        _
    $region6: #{tpu_custom_call.1} parent=1 // loop_footer
      %s19 = sadd.s32 1, %s15
    $region7: #{tpu_custom_call.1} parent=1 // loop_footer_branch
      %14 = sbr.rel target = $region3
    $region8: #{tpu_custom_call.1} parent=1 // loop_exit
      _
    %441 = vsyncpa [#allocation3], 1
    %s442 = scalar_lea.sflag [#allocation3], 1
    %443 = vsyncpa %s442, 1
    %444 = vsyncpa [#allocation4], 1
    %s445 = scalar_lea.sflag [#allocation4], 1
    %446 = vsyncpa %s445, 1

</llo_original>
